<compile_context>
chip_gen: v5e
topology: v5e:2x2
jax: 0.10.0
libtpu: 0.0.40
codegen_flags: <defaults>
</compile_context>

<pallas_src>
import math
import jax
import jax.numpy as jnp
from jax.experimental import pallas as pl
from jax.experimental.pallas import tpu as pltpu

LANE = 128  # vreg lane width; feature dims are padded to multiples of this.


def _round_up(x, m):
    return ((x + m - 1) // m) * m


def mlp_kernel(x_ref, w1_ref, b1_ref, w2_ref, b2_ref, o_ref, acc_ref):
    """One (row-tile i, mid-tile k) grid step of the fused MLP.

    fc1 partial : h   = relu(x @ W1[:, k-tile] + b1[k-tile])   (MXU, bias/ReLU f32 on VPU)
    fc2 partial : acc += h @ W2[k-tile, :]                      (MXU, f32 accumulate)
    finalize    : out = acc + b2                                (last k step only)
    """
    k = pl.program_id(1)

    @pl.when(k == 0)
    def _init():
        acc_ref[...] = jnp.zeros_like(acc_ref)

    h = jnp.dot(x_ref[...], w1_ref[...], preferred_element_type=jnp.float32)
    h = jnp.maximum(h + b1_ref[...], 0.0)  # bias broadcast + ReLU once per invocation, f32
    # TODO(synk): dropout_r > 0 (training-mode dropout) not implemented; default r=0.0 is identity.

    acc_ref[...] += jnp.dot(h.astype(w2_ref.dtype), w2_ref[...],
                            preferred_element_type=jnp.float32)

    @pl.when(k == pl.num_programs(1) - 1)
    def _finalize():
        o_ref[...] = (acc_ref[...] + b2_ref[...]).astype(o_ref.dtype)


def mlp_pallas(x, w1, b1, w2, b2, *, tm=256, tmid=None, matmul_dtype=jnp.bfloat16):
    """x: (..., in_dim). Returns (..., out_dim). Fused MLP in one Pallas kernel."""
    orig_lead = x.shape[:-1]
    in_dim = x.shape[-1]
    mid_dim = w1.shape[1]
    out_dim = w2.shape[1]
    assert w1.shape[0] == in_dim and w2.shape[0] == mid_dim
    M = math.prod(orig_lead) if orig_lead else 1
    out_dtype = x.dtype

    # Lane-dense (multiple-of-128) feature dims: unmasked stores, full MXU tiles.
    in_p = _round_up(in_dim, LANE)
    out_p = _round_up(out_dim, LANE)
    mid_p = _round_up(mid_dim, LANE)

    # Mid-dim tile: whole mid resident by default; pass a smaller tmid to stream weight
    # tiles over a reduction grid axis when resident weights would overflow VMEM (v7x).
    if tmid is None:
        tmid = mid_p
    tmid = min(_round_up(tmid, LANE), mid_p)
    mid_p = _round_up(mid_p, tmid)  # make mid_p divisible by tmid

    # Row tile: multiple of 128 (MXU height); don't blow up a tiny batch, pad the rest.
    tm = max(LANE, _round_up(tm, LANE))
    tm = min(tm, _round_up(M, LANE))
    M_p = _round_up(M, tm)

    n_i = M_p // tm
    n_k = mid_p // tmid

    # Pad + cast MXU operands (bf16 by default); biases stay f32 for the VPU epilogue.
    x2 = jnp.pad(x.reshape(M, in_dim), ((0, M_p - M), (0, in_p - in_dim))).astype(matmul_dtype)
    w1p = jnp.pad(w1, ((0, in_p - in_dim), (0, mid_p - mid_dim))).astype(matmul_dtype)
    w2p = jnp.pad(w2, ((0, mid_p - mid_dim), (0, out_p - out_dim))).astype(matmul_dtype)
    b1p = jnp.pad(b1.astype(jnp.float32), (0, mid_p - mid_dim)).reshape(1, mid_p)
    b2p = jnp.pad(b2.astype(jnp.float32), (0, out_p - out_dim)).reshape(1, out_p)

    # Single-buffer blocks whose block index never changes over the grid (no re-DMA
    # needed, and half the VMEM vs. default double buffering).
    resident = pl.Buffered(1)
    w_mode = resident if n_k == 1 else None  # w1/b1/w2 move along k when mid is split

    in_specs = [
        pl.BlockSpec((tm, in_p), lambda i, k: (i, 0)),                            # x rows
        pl.BlockSpec((in_p, tmid), lambda i, k: (0, k), pipeline_mode=w_mode),    # W1
        pl.BlockSpec((1, tmid), lambda i, k: (0, k), pipeline_mode=w_mode),       # b1
        pl.BlockSpec((tmid, out_p), lambda i, k: (k, 0), pipeline_mode=w_mode),   # W2
        pl.BlockSpec((1, out_p), lambda i, k: (0, 0), pipeline_mode=resident),    # b2
    ]
    out_spec = pl.BlockSpec((tm, out_p), lambda i, k: (i, 0))

    itemsize = jnp.dtype(matmul_dtype).itemsize
    cost = pl.CostEstimate(
        flops=2 * M_p * (in_p * mid_p + mid_p * out_p),
        transcendentals=0,
        bytes_accessed=((x2.size + w1p.size + w2p.size) * itemsize
                        + (b1p.size + b2p.size) * 4
                        + M_p * out_p * jnp.dtype(out_dtype).itemsize),
    )

    out = pl.pallas_call(
        mlp_kernel,
        out_shape=jax.ShapeDtypeStruct((M_p, out_p), out_dtype),
        grid_spec=pltpu.PrefetchScalarGridSpec(
            num_scalar_prefetch=0,
            grid=(n_i, n_k),
            in_specs=in_specs,
            out_specs=out_spec,
            scratch_shapes=[pltpu.VMEM((tm, out_p), jnp.float32)],  # fc2 accumulator
        ),
        compiler_params=pltpu.CompilerParams(
            dimension_semantics=("parallel", "arbitrary"),
            vmem_limit_bytes=64 * 1024 * 1024,
        ),
        cost_estimate=cost,
    )(x2, w1p, b1p, w2p, b2p)

    return out[:M, :out_dim].reshape(*orig_lead, out_dim)


def _init_linear_params(key, in_size, out_size, dtype=jnp.float32):
    """Deterministic init mimicking nn.Linear (uniform +-1/sqrt(in)); W stored (in, out)."""
    kw, kb = jax.random.split(key)
    bound = 1.0 / math.sqrt(in_size)
    w = jax.random.uniform(kw, (in_size, out_size), dtype, minval=-bound, maxval=bound)
    b = jax.random.uniform(kb, (out_size,), dtype, minval=-bound, maxval=bound)
    return w, b


def _mlp_ref(x, w1, b1, w2, b2):
    return jnp.maximum(x @ w1 + b1, 0.0) @ w2 + b2


if __name__ == "__main__":
    key = jax.random.PRNGKey(0)
    kx, k1, k2, kx2, k3, k4 = jax.random.split(key, 6)

    # Small shapes consistent with the module: x of shape (batch, seq, in_dim).
    batch, seq = 2, 8
    in_dim, mid_dim, out_dim = 32, 64, 32
    x = jax.random.normal(kx, (batch, seq, in_dim), jnp.float32)
    w1, b1 = _init_linear_params(k1, in_dim, mid_dim)
    w2, b2 = _init_linear_params(k2, mid_dim, out_dim)
    ref = _mlp_ref(x, w1, b1, w2, b2)

    # 1) f32 MXU path (tight check).
    out_f32 = jax.block_until_ready(
        mlp_pallas(x, w1, b1, w2, b2, tm=128, matmul_dtype=jnp.float32))
    assert out_f32.shape == (batch, seq, out_dim)
    assert jnp.allclose(out_f32, ref, atol=1e-5, rtol=1e-5), "f32 mismatch vs reference"

    # 2) Default path: bf16 MXU operands, f32 accumulation (loose check).
    out_bf16 = jax.block_until_ready(mlp_pallas(x, w1, b1, w2, b2))
    assert out_bf16.shape == (batch, seq, out_dim)
    assert jnp.allclose(out_bf16, ref, atol=5e-2, rtol=5e-2), "bf16 mismatch vs reference"

    # 3) Exercise the split-mid path (reduction grid axis + f32 scratch accumulator),
    #    used when resident weights would not fit VMEM (e.g. v7x's 64 MiB).
    in2, mid2, out2 = 48, 300, 40
    x_b = jax.random.normal(kx2, (batch, seq, in2), jnp.float32)
    w1b, b1b = _init_linear_params(k3, in2, mid2)
    w2b, b2b = _init_linear_params(k4, mid2, out2)
    out_split = jax.block_until_ready(
        mlp_pallas(x_b, w1b, b1b, w2b, b2b, tm=128, tmid=128, matmul_dtype=jnp.float32))
    ref_b = _mlp_ref(x_b, w1b, b1b, w2b, b2b)
    assert out_split.shape == (batch, seq, out2)
    assert jnp.allclose(out_split, ref_b, atol=1e-4, rtol=1e-4), "split-mid mismatch vs reference"

    print("KERNEL_OK")
</pallas_src>

<mosaic_0001>
module attributes {stable_mosaic.version = 11 : i64} {
  func.func @mlp_kernel(%arg0: i32, %arg1: i32, %arg2: memref<128x128xf32, #tpu.memory_space<vmem>>, %arg3: memref<128x128xf32, #tpu.memory_space<vmem>>, %arg4: memref<1x128xf32, #tpu.memory_space<vmem>>, %arg5: memref<128x128xf32, #tpu.memory_space<vmem>>, %arg6: memref<1x128xf32, #tpu.memory_space<vmem>>, %arg7: memref<128x128xf32, #tpu.memory_space<vmem>>, %arg8: memref<128x128xf32, #tpu.memory_space<vmem>>) attributes {dimension_semantics = [#tpu.dimension_semantics<parallel>, #tpu.dimension_semantics<arbitrary>], iteration_bounds = array<i64: 1, 1>, scalar_prefetch = 0 : i64, scratch_operands = 1 : i64, tpu.core_type = #tpu.core_type<tc>, window_params = [{transform_indices = @transform_0, window_bounds = array<i64: 128, 128>}, {pipeline_mode = #tpu.pipeline_mode<synchronous>, transform_indices = @transform_1, window_bounds = array<i64: 128, 128>}, {pipeline_mode = #tpu.pipeline_mode<synchronous>, transform_indices = @transform_2, window_bounds = array<i64: 1, 128>}, {pipeline_mode = #tpu.pipeline_mode<synchronous>, transform_indices = @transform_3, window_bounds = array<i64: 128, 128>}, {pipeline_mode = #tpu.pipeline_mode<synchronous>, transform_indices = @transform_4, window_bounds = array<i64: 1, 128>}, {transform_indices = @transform_5, window_bounds = array<i64: 128, 128>}]} {
    %c0_i32 = arith.constant 0 : i32
    %0 = arith.cmpi eq, %arg1, %c0_i32 : i32
    %1 = arith.extui %0 : i1 to i32
    %c0_i32_0 = arith.constant 0 : i32
    %2 = arith.cmpi ne, %1, %c0_i32_0 : i32
    scf.if %2 {
      %cst_16 = arith.constant 0.000000e+00 : f32
      %19 = vector.broadcast %cst_16 : f32 to vector<128x128xf32>
      %c0_17 = arith.constant 0 : index
      %c0_18 = arith.constant 0 : index
      %20 = vector.load %arg8[%c0_17, %c0_18] : memref<128x128xf32, #tpu.memory_space<vmem>>, vector<128x128xf32>
      tpu.vector_store %arg8[%c0_17, %c0_18], %19 {strides = array<i32>} : memref<128x128xf32, #tpu.memory_space<vmem>>, vector<128x128xf32>,
    } else {
    }
    %c0 = arith.constant 0 : index
    %c0_1 = arith.constant 0 : index
    %3 = vector.load %arg2[%c0, %c0_1] : memref<128x128xf32, #tpu.memory_space<vmem>>, vector<128x128xf32>
    %c0_2 = arith.constant 0 : index
    %c0_3 = arith.constant 0 : index
    %4 = vector.load %arg3[%c0_2, %c0_3] : memref<128x128xf32, #tpu.memory_space<vmem>>, vector<128x128xf32>
    %cst = arith.constant dense<0.000000e+00> : vector<128x128xf32>
    %5 = tpu.matmul %3, %4, %cst {dimension_numbers = #tpu.dot_dimension_numbers<[1], [0], [0], [1], [0, 0, 1, 1], [], []>} : vector<128x128xf32>, vector<128x128xf32>, vector<128x128xf32> -> vector<128x128xf32>
    %c0_4 = arith.constant 0 : index
    %c0_5 = arith.constant 0 : index
    %6 = vector.load %arg4[%c0_4, %c0_5] : memref<1x128xf32, #tpu.memory_space<vmem>>, vector<1x128xf32>
    %7 = vector.broadcast %6 : vector<1x128xf32> to vector<128x128xf32>
    %8 = arith.addf %5, %7 : vector<128x128xf32>
    %cst_6 = arith.constant 0.000000e+00 : f32
    %9 = vector.broadcast %cst_6 : f32 to vector<128x128xf32>
    %10 = arith.maximumf %8, %9 : vector<128x128xf32>
    %c0_7 = arith.constant 0 : index
    %c0_8 = arith.constant 0 : index
    %11 = vector.load %arg8[%c0_7, %c0_8] : memref<128x128xf32, #tpu.memory_space<vmem>>, vector<128x128xf32>
    %c0_9 = arith.constant 0 : index
    %c0_10 = arith.constant 0 : index
    %12 = vector.load %arg5[%c0_9, %c0_10] : memref<128x128xf32, #tpu.memory_space<vmem>>, vector<128x128xf32>
    %cst_11 = arith.constant dense<0.000000e+00> : vector<128x128xf32>
    %13 = tpu.matmul %10, %12, %cst_11 {dimension_numbers = #tpu.dot_dimension_numbers<[1], [0], [0], [1], [0, 0, 1, 1], [], []>} : vector<128x128xf32>, vector<128x128xf32>, vector<128x128xf32> -> vector<128x128xf32>
    %14 = arith.addf %11, %13 : vector<128x128xf32>
    %c0_12 = arith.constant 0 : index
    %c0_13 = arith.constant 0 : index
    %15 = vector.load %arg8[%c0_12, %c0_13] : memref<128x128xf32, #tpu.memory_space<vmem>>, vector<128x128xf32>
    tpu.vector_store %arg8[%c0_12, %c0_13], %14 {strides = array<i32>} : memref<128x128xf32, #tpu.memory_space<vmem>>, vector<128x128xf32>,
    %c0_i32_14 = arith.constant 0 : i32
    %16 = arith.cmpi eq, %arg1, %c0_i32_14 : i32
    %17 = arith.extui %16 : i1 to i32
    %c0_i32_15 = arith.constant 0 : i32
    %18 = arith.cmpi ne, %17, %c0_i32_15 : i32
    scf.if %18 {
      %c0_16 = arith.constant 0 : index
      %c0_17 = arith.constant 0 : index
      %19 = vector.load %arg8[%c0_16, %c0_17] : memref<128x128xf32, #tpu.memory_space<vmem>>, vector<128x128xf32>
      %c0_18 = arith.constant 0 : index
      %c0_19 = arith.constant 0 : index
      %20 = vector.load %arg6[%c0_18, %c0_19] : memref<1x128xf32, #tpu.memory_space<vmem>>, vector<1x128xf32>
      %21 = vector.broadcast %20 : vector<1x128xf32> to vector<128x128xf32>
      %22 = arith.addf %19, %21 : vector<128x128xf32>
      %c0_20 = arith.constant 0 : index
      %c0_21 = arith.constant 0 : index
      %23 = vector.load %arg7[%c0_20, %c0_21] : memref<128x128xf32, #tpu.memory_space<vmem>>, vector<128x128xf32>
      tpu.vector_store %arg7[%c0_20, %c0_21], %22 {strides = array<i32>} : memref<128x128xf32, #tpu.memory_space<vmem>>, vector<128x128xf32>,
    } else {
    }
    return
  }
  func.func @transform_0(%arg0: i32, %arg1: i32) -> (i32, i32) {
    %c0_i32 = arith.constant 0 : i32
    %c0_i32_0 = arith.constant 0 : i32
    return %arg0, %c0_i32 : i32, i32
  }
  func.func @transform_1(%arg0: i32, %arg1: i32) -> (i32, i32) {
    %c0_i32 = arith.constant 0 : i32
    %c0_i32_0 = arith.constant 0 : i32
    return %c0_i32, %arg1 : i32, i32
  }
  func.func @transform_2(%arg0: i32, %arg1: i32) -> (i32, i32) {
    %c0_i32 = arith.constant 0 : i32
    %c0_i32_0 = arith.constant 0 : i32
    return %c0_i32, %arg1 : i32, i32
  }
  func.func @transform_3(%arg0: i32, %arg1: i32) -> (i32, i32) {
    %c0_i32 = arith.constant 0 : i32
    %c0_i32_0 = arith.constant 0 : i32
    return %arg1, %c0_i32 : i32, i32
  }
  func.func @transform_4(%arg0: i32, %arg1: i32) -> (i32, i32) {
    %c0_i32 = arith.constant 0 : i32
    %c0_i32_0 = arith.constant 0 : i32
    %c0_i32_1 = arith.constant 0 : i32
    return %c0_i32, %c0_i32_0 : i32, i32
  }
  func.func @transform_5(%arg0: i32, %arg1: i32) -> (i32, i32) {
    %c0_i32 = arith.constant 0 : i32
    %c0_i32_0 = arith.constant 0 : i32
    return %arg0, %c0_i32 : i32, i32
  }
}

</mosaic_0001>

<llo_original>
// kernel: tpu_custom_call.1
$region0: #{tpu_custom_call.1}
  #allocation0 [shape = 'u32[]', space=smem, size = 0x4, offset = 0x4, fixed_abs, tag = 'smem constant byte address 0x4 - core index']
  #allocation1 [shape = 'u32[72,128]{1,0:T(1,128)}', space=vmem, size = 0x9000, scoped, tag = 'internal scratch']
  #allocation2 [shape = 'f32[128,128]{1,0:T(8,128)}', space=vmem, size = 0x10000, scoped, tag = 'scratch operand']
  %s0 = inlined_call_operand.hbm [shape: f32[128,128], index: 0, kind: input, shape index: {}]
  %s1 = inlined_call_operand.hbm [shape: f32[128,128], index: 1, kind: input, shape index: {}]
  %s2 = inlined_call_operand.vmem [shape: f32[1,128], index: 2, kind: input, shape index: {}]
  %s3 = inlined_call_operand.hbm [shape: f32[128,128], index: 3, kind: input, shape index: {}]
  %s4 = inlined_call_operand.vmem [shape: f32[1,128], index: 4, kind: input, shape index: {}]
  %s5 = inlined_call_operand.hbm [shape: f32[128,128], index: 5, kind: output, shape index: {}]
  %s6 = sld [smem:[#allocation0]]
  $region50: #{tpu_custom_call.1} parent=0
    _
  %s8 = ssub.s32 1, %s6
  %s9 = scalar_select 0, %s8, %s6
  $region1: #{tpu_custom_call.1} parent=0
    #allocation3 [shape = 'u8[65536]{0}', space=vmem, size = 0x10000, scoped, tag = 'input window, operand 0, single buffered']
    #allocation4 [shape = 's32[1]{0}', space=sflag, size = 0x4, scoped, tag = 'scoped memory for tpu_custom_call.1']
    #allocation5 [shape = 's32[1]{0}', space=sflag, size = 0x4, scoped, tag = 'scoped memory for tpu_custom_call.1']
    #allocation6 [shape = 'u8[65536]{0}', space=vmem, size = 0x10000, scoped, tag = 'input window, operand 1, single buffered']
    #allocation7 [shape = 's32[1]{0}', space=sflag, size = 0x4, scoped, tag = 'scoped memory for tpu_custom_call.1']
    #allocation8 [shape = 'u8[65536]{0}', space=vmem, size = 0x10000, scoped, tag = 'input window, operand 3, single buffered']
    #allocation9 [shape = 'u8[65536]{0}', space=vmem, size = 0x10000, scoped, tag = 'output window, operand 0, single buffered']
    %10 = vsyncpa [#allocation4], 0
    %11 = vsyncpa [#allocation7], 0
    %12 = vsyncpa [#allocation5], 0
    // Predicated region
    $region2: #{tpu_custom_call.1} parent=1 // pred_check
      _
    $region3: #{tpu_custom_call.1} parent=1 // pred_check_branch
      %14 = sbr.rel (0) target = $region5
    $region4: #{tpu_custom_call.1} parent=1 // pred_region
      %16 = vsyncadd [#allocation4], 0
      %s17 = sshll.u32 %s0, 4
      %s18 = int_to_ptr.hbm [resolvable:$true] %s17
      %s19 = sshll.u32 [#allocation3], 4
      %s20 = int_to_ptr.vmem [resolvable:$true] %s19
      %25 = dma.hbm_to_vmem [thread:$0]  %s18, 2048, %s20, [#allocation4], 128, 128, 8
    $region5: #{tpu_custom_call.1} parent=1 // pred_fallthru
      _
    // Predicated region
    $region6: #{tpu_custom_call.1} parent=1 // pred_check
      _
    $region7: #{tpu_custom_call.1} parent=1 // pred_check_branch
      %27 = sbr.rel (0) target = $region9
    $region8: #{tpu_custom_call.1} parent=1 // pred_region
      %29 = vsyncadd [#allocation7], 0
      %s30 = sshll.u32 %s1, 4
      %s31 = int_to_ptr.hbm [resolvable:$true] %s30
      %s32 = sshll.u32 [#allocation6], 4
      %s33 = int_to_ptr.vmem [resolvable:$true] %s32
      %38 = dma.hbm_to_vmem [thread:$0]  %s31, 2048, %s33, [#allocation7], 128, 128, 8
    $region9: #{tpu_custom_call.1} parent=1 // pred_fallthru
      _
    // Predicated region
    $region10: #{tpu_custom_call.1} parent=1 // pred_check
      _
    $region11: #{tpu_custom_call.1} parent=1 // pred_check_branch
      %40 = sbr.rel (0) target = $region13
    $region12: #{tpu_custom_call.1} parent=1 // pred_region
      _
    $region13: #{tpu_custom_call.1} parent=1 // pred_fallthru
      _
    // Predicated region
    $region14: #{tpu_custom_call.1} parent=1 // pred_check
      _
    $region15: #{tpu_custom_call.1} parent=1 // pred_check_branch
      %42 = sbr.rel (0) target = $region17
    $region16: #{tpu_custom_call.1} parent=1 // pred_region
      %44 = vsyncadd [#allocation7], 0
      %s45 = sshll.u32 %s3, 4
      %s46 = int_to_ptr.hbm [resolvable:$true] %s45
      %s47 = sshll.u32 [#allocation8], 4
      %s48 = int_to_ptr.vmem [resolvable:$true] %s47
      %53 = dma.hbm_to_vmem [thread:$0]  %s46, 2048, %s48, [#allocation7], 128, 128, 8
    $region17: #{tpu_custom_call.1} parent=1 // pred_fallthru
      _
    // Predicated region
    $region18: #{tpu_custom_call.1} parent=1 // pred_check
      _
    $region19: #{tpu_custom_call.1} parent=1 // pred_check_branch
      %55 = sbr.rel (0) target = $region21
    $region20: #{tpu_custom_call.1} parent=1 // pred_region
      _
    $region21: #{tpu_custom_call.1} parent=1 // pred_fallthru
      _
    // Predicated region
    $region22: #{tpu_custom_call.1} parent=1 // pred_check
      _
    $region23: #{tpu_custom_call.1} parent=1 // pred_check_branch
      %57 = sbr.rel (0) target = $region25
    $region24: #{tpu_custom_call.1} parent=1 // pred_region
      %59 = dma.done [#allocation4], 2048
    $region25: #{tpu_custom_call.1} parent=1 // pred_fallthru
      _
    // Predicated region
    $region26: #{tpu_custom_call.1} parent=1 // pred_check
      _
    $region27: #{tpu_custom_call.1} parent=1 // pred_check_branch
      %61 = sbr.rel (0) target = $region29
    $region28: #{tpu_custom_call.1} parent=1 // pred_region
      %63 = dma.done [#allocation7], 2048
    $region29: #{tpu_custom_call.1} parent=1 // pred_fallthru
      _
    // Predicated region
    $region30: #{tpu_custom_call.1} parent=1 // pred_check
      _
    $region31: #{tpu_custom_call.1} parent=1 // pred_check_branch
      %65 = sbr.rel (0) target = $region33
    $region32: #{tpu_custom_call.1} parent=1 // pred_region
      %67 = dma.done [#allocation7], 2048
    $region33: #{tpu_custom_call.1} parent=1 // pred_fallthru
      _
    %p68 = scmp.eq.s32.totalorder 0, 0
    // Predicated region
    $region34: #{tpu_custom_call.1} parent=1 // pred_check
      %p69 = pneg %p68
    $region35: #{tpu_custom_call.1} parent=1 // pred_check_branch
      %71 = sbr.rel (%p69) target = $region37
    $region36: #{tpu_custom_call.1} parent=1 // pred_region
      %72 = vst [vmem:[#allocation2] sm:$0xff] 0.0
      %73 = vst [vmem:[#allocation2 + $0x8] sm:$0xff] 0.0
      %74 = vst [vmem:[#allocation2 + $0x10] sm:$0xff] 0.0
      %75 = vst [vmem:[#allocation2 + $0x18] sm:$0xff] 0.0
      %76 = vst [vmem:[#allocation2 + $0x20] sm:$0xff] 0.0
      %77 = vst [vmem:[#allocation2 + $0x28] sm:$0xff] 0.0
      %78 = vst [vmem:[#allocation2 + $0x30] sm:$0xff] 0.0
      %79 = vst [vmem:[#allocation2 + $0x38] sm:$0xff] 0.0
      %80 = vst [vmem:[#allocation2 + $0x40] sm:$0xff] 0.0
      %81 = vst [vmem:[#allocation2 + $0x48] sm:$0xff] 0.0
      %82 = vst [vmem:[#allocation2 + $0x50] sm:$0xff] 0.0
      %83 = vst [vmem:[#allocation2 + $0x58] sm:$0xff] 0.0
      %84 = vst [vmem:[#allocation2 + $0x60] sm:$0xff] 0.0
      %85 = vst [vmem:[#allocation2 + $0x68] sm:$0xff] 0.0
      %86 = vst [vmem:[#allocation2 + $0x70] sm:$0xff] 0.0
      %87 = vst [vmem:[#allocation2 + $0x78] sm:$0xff] 0.0
    $region37: #{tpu_custom_call.1} parent=1 // pred_fallthru
      _
    %v88 = vld [vmem:[#allocation3] sm:$0xff]
    %v89 = vld [vmem:[#allocation3 + $0x8] sm:$0xff]
    %v90 = vld [vmem:[#allocation3 + $0x10] sm:$0xff]
    %v91 = vld [vmem:[#allocation3 + $0x18] sm:$0xff]
    %v92 = vld [vmem:[#allocation3 + $0x20] sm:$0xff]
    %v93 = vld [vmem:[#allocation3 + $0x28] sm:$0xff]
    %v94 = vld [vmem:[#allocation3 + $0x30] sm:$0xff]
    %v95 = vld [vmem:[#allocation3 + $0x38] sm:$0xff]
    %v96 = vld [vmem:[#allocation3 + $0x40] sm:$0xff]
    %v97 = vld [vmem:[#allocation3 + $0x48] sm:$0xff]
    %v98 = vld [vmem:[#allocation3 + $0x50] sm:$0xff]
    %v99 = vld [vmem:[#allocation3 + $0x58] sm:$0xff]
    %v100 = vld [vmem:[#allocation3 + $0x60] sm:$0xff]
    %v101 = vld [vmem:[#allocation3 + $0x68] sm:$0xff]
    %v102 = vld [vmem:[#allocation3 + $0x70] sm:$0xff]
    %v103 = vld [vmem:[#allocation3 + $0x78] sm:$0xff]
    %v104 = vld [vmem:[#allocation6] sm:$0xff]
    %v105 = vld [vmem:[#allocation6 + $0x8] sm:$0xff]
    %v106 = vld [vmem:[#allocation6 + $0x10] sm:$0xff]
    %v107 = vld [vmem:[#allocation6 + $0x18] sm:$0xff]
    %v108 = vld [vmem:[#allocation6 + $0x20] sm:$0xff]
    %v109 = vld [vmem:[#allocation6 + $0x28] sm:$0xff]
    %v110 = vld [vmem:[#allocation6 + $0x30] sm:$0xff]
    %v111 = vld [vmem:[#allocation6 + $0x38] sm:$0xff]
    %v112 = vld [vmem:[#allocation6 + $0x40] sm:$0xff]
    %v113 = vld [vmem:[#allocation6 + $0x48] sm:$0xff]
    %v114 = vld [vmem:[#allocation6 + $0x50] sm:$0xff]
    %v115 = vld [vmem:[#allocation6 + $0x58] sm:$0xff]
    %v116 = vld [vmem:[#allocation6 + $0x60] sm:$0xff]
    %v117 = vld [vmem:[#allocation6 + $0x68] sm:$0xff]
    %v118 = vld [vmem:[#allocation6 + $0x70] sm:$0xff]
    %v119 = vld [vmem:[#allocation6 + $0x78] sm:$0xff]
    %v120 = vld [vmem:[%s2] sm:$0x1]
    %v122 = vperm.slane %v120, 0
    %124 = vmatpush.msra.mxu0 %v119
    %125 = vmatpush.msra.mxu0 %v118
    %126 = vmatpush.msra.mxu0 %v117
    %127 = vmatpush.msra.mxu0 %v116
    %128 = vmatpush.msra.mxu0 %v115
    %129 = vmatpush.msra.mxu0 %v114
    %130 = vmatpush.msra.mxu0 %v113
    %131 = vmatpush.msra.mxu0 %v112
    %132 = vmatpush.msra.mxu0 %v111
    %133 = vmatpush.msra.mxu0 %v110
    %134 = vmatpush.msra.mxu0 %v109
    %135 = vmatpush.msra.mxu0 %v108
    %136 = vmatpush.msra.mxu0 %v107
    %137 = vmatpush.msra.mxu0 %v106
    %138 = vmatpush.msra.mxu0 %v105
    %139 = vmatpush.msra.mxu0 %v104
    %140 = vmatmul.f32.gmra.mxu0 %v88
    %v141 = vpop.f32.mrf.mxu0
    %v142 = vadd.f32 %v122, %v141
    %143 = vmatmul.f32.gmra.mxu0 %v89
    %v144 = vpop.f32.mrf.mxu0
    %v145 = vadd.f32 %v122, %v144
    %146 = vmatmul.f32.gmra.mxu0 %v90
    %v147 = vpop.f32.mrf.mxu0
    %v148 = vadd.f32 %v122, %v147
    %149 = vmatmul.f32.gmra.mxu0 %v91
    %v150 = vpop.f32.mrf.mxu0
    %v151 = vadd.f32 %v122, %v150
    %152 = vmatmul.f32.gmra.mxu0 %v92
    %v153 = vpop.f32.mrf.mxu0
    %v154 = vadd.f32 %v122, %v153
    %155 = vmatmul.f32.gmra.mxu0 %v93
    %v156 = vpop.f32.mrf.mxu0
    %v157 = vadd.f32 %v122, %v156
    %158 = vmatmul.f32.gmra.mxu0 %v94
    %v159 = vpop.f32.mrf.mxu0
    %v160 = vadd.f32 %v122, %v159
    %161 = vmatmul.f32.gmra.mxu0 %v95
    %v162 = vpop.f32.mrf.mxu0
    %v163 = vadd.f32 %v122, %v162
    %164 = vmatmul.f32.gmra.mxu0 %v96
    %v165 = vpop.f32.mrf.mxu0
    %v166 = vadd.f32 %v122, %v165
    %167 = vmatmul.f32.gmra.mxu0 %v97
    %v168 = vpop.f32.mrf.mxu0
    %v169 = vadd.f32 %v122, %v168
    %170 = vmatmul.f32.gmra.mxu0 %v98
    %v171 = vpop.f32.mrf.mxu0
    %v172 = vadd.f32 %v122, %v171
    %173 = vmatmul.f32.gmra.mxu0 %v99
    %v174 = vpop.f32.mrf.mxu0
    %v175 = vadd.f32 %v122, %v174
    %176 = vmatmul.f32.gmra.mxu0 %v100
    %v177 = vpop.f32.mrf.mxu0
    %v178 = vadd.f32 %v122, %v177
    %179 = vmatmul.f32.gmra.mxu0 %v101
    %v180 = vpop.f32.mrf.mxu0
    %v181 = vadd.f32 %v122, %v180
    %182 = vmatmul.f32.gmra.mxu0 %v102
    %v183 = vpop.f32.mrf.mxu0
    %v184 = vadd.f32 %v122, %v183
    %185 = vmatmul.f32.gmra.mxu0 %v103
    %v186 = vpop.f32.mrf.mxu0
    %v187 = vadd.f32 %v122, %v186
    %188 = vdwg.mxu0
    %v189 = vmax.f32 %v142, 0.0
    %v190 = vmax.f32 %v145, 0.0
    %v191 = vmax.f32 %v148, 0.0
    %v192 = vmax.f32 %v151, 0.0
    %v193 = vmax.f32 %v154, 0.0
    %v194 = vmax.f32 %v157, 0.0
    %v195 = vmax.f32 %v160, 0.0
    %v196 = vmax.f32 %v163, 0.0
    %v197 = vmax.f32 %v166, 0.0
    %v198 = vmax.f32 %v169, 0.0
    %v199 = vmax.f32 %v172, 0.0
    %v200 = vmax.f32 %v175, 0.0
    %v201 = vmax.f32 %v178, 0.0
    %v202 = vmax.f32 %v181, 0.0
    %v203 = vmax.f32 %v184, 0.0
    %v204 = vmax.f32 %v187, 0.0
    %v205 = vld [vmem:[#allocation2] sm:$0xff]
    %v206 = vld [vmem:[#allocation2 + $0x8] sm:$0xff]
    %v207 = vld [vmem:[#allocation2 + $0x10] sm:$0xff]
    %v208 = vld [vmem:[#allocation2 + $0x18] sm:$0xff]
    %v209 = vld [vmem:[#allocation2 + $0x20] sm:$0xff]
    %v210 = vld [vmem:[#allocation2 + $0x28] sm:$0xff]
    %v211 = vld [vmem:[#allocation2 + $0x30] sm:$0xff]
    %v212 = vld [vmem:[#allocation2 + $0x38] sm:$0xff]
    %v213 = vld [vmem:[#allocation2 + $0x40] sm:$0xff]
    %v214 = vld [vmem:[#allocation2 + $0x48] sm:$0xff]
    %v215 = vld [vmem:[#allocation2 + $0x50] sm:$0xff]
    %v216 = vld [vmem:[#allocation2 + $0x58] sm:$0xff]
    %v217 = vld [vmem:[#allocation2 + $0x60] sm:$0xff]
    %v218 = vld [vmem:[#allocation2 + $0x68] sm:$0xff]
    %v219 = vld [vmem:[#allocation2 + $0x70] sm:$0xff]
    %v220 = vld [vmem:[#allocation2 + $0x78] sm:$0xff]
    %v221 = vld [vmem:[#allocation8] sm:$0xff]
    %v222 = vld [vmem:[#allocation8 + $0x8] sm:$0xff]
    %v223 = vld [vmem:[#allocation8 + $0x10] sm:$0xff]
    %v224 = vld [vmem:[#allocation8 + $0x18] sm:$0xff]
    %v225 = vld [vmem:[#allocation8 + $0x20] sm:$0xff]
    %v226 = vld [vmem:[#allocation8 + $0x28] sm:$0xff]
    %v227 = vld [vmem:[#allocation8 + $0x30] sm:$0xff]
    %v228 = vld [vmem:[#allocation8 + $0x38] sm:$0xff]
    %v229 = vld [vmem:[#allocation8 + $0x40] sm:$0xff]
    %v230 = vld [vmem:[#allocation8 + $0x48] sm:$0xff]
    %v231 = vld [vmem:[#allocation8 + $0x50] sm:$0xff]
    %v232 = vld [vmem:[#allocation8 + $0x58] sm:$0xff]
    %v233 = vld [vmem:[#allocation8 + $0x60] sm:$0xff]
    %v234 = vld [vmem:[#allocation8 + $0x68] sm:$0xff]
    %v235 = vld [vmem:[#allocation8 + $0x70] sm:$0xff]
    %v236 = vld [vmem:[#allocation8 + $0x78] sm:$0xff]
    %237 = vmatpush.msra.mxu0 %v236
    %238 = vmatpush.msra.mxu0 %v235
    %239 = vmatpush.msra.mxu0 %v234
    %240 = vmatpush.msra.mxu0 %v233
    %241 = vmatpush.msra.mxu0 %v232
    %242 = vmatpush.msra.mxu0 %v231
    %243 = vmatpush.msra.mxu0 %v230
    %244 = vmatpush.msra.mxu0 %v229
    %245 = vmatpush.msra.mxu0 %v228
    %246 = vmatpush.msra.mxu0 %v227
    %247 = vmatpush.msra.mxu0 %v226
    %248 = vmatpush.msra.mxu0 %v225
    %249 = vmatpush.msra.mxu0 %v224
    %250 = vmatpush.msra.mxu0 %v223
    %251 = vmatpush.msra.mxu0 %v222
    %252 = vmatpush.msra.mxu0 %v221
    %253 = vmatmul.f32.gmra.mxu0 %v189
    %v254 = vpop.f32.mrf.mxu0
    %v255 = vadd.f32 0.0, %v254
    %256 = vmatmul.f32.gmra.mxu0 %v190
    %v257 = vpop.f32.mrf.mxu0
    %v258 = vadd.f32 0.0, %v257
    %259 = vmatmul.f32.gmra.mxu0 %v191
    %v260 = vpop.f32.mrf.mxu0
    %v261 = vadd.f32 0.0, %v260
    %262 = vmatmul.f32.gmra.mxu0 %v192
    %v263 = vpop.f32.mrf.mxu0
    %v264 = vadd.f32 0.0, %v263
    %265 = vmatmul.f32.gmra.mxu0 %v193
    %v266 = vpop.f32.mrf.mxu0
    %v267 = vadd.f32 0.0, %v266
    %268 = vmatmul.f32.gmra.mxu0 %v194
    %v269 = vpop.f32.mrf.mxu0
    %v270 = vadd.f32 0.0, %v269
    %271 = vmatmul.f32.gmra.mxu0 %v195
    %v272 = vpop.f32.mrf.mxu0
    %v273 = vadd.f32 0.0, %v272
    %274 = vmatmul.f32.gmra.mxu0 %v196
    %v275 = vpop.f32.mrf.mxu0
    %v276 = vadd.f32 0.0, %v275
    %277 = vmatmul.f32.gmra.mxu0 %v197
    %v278 = vpop.f32.mrf.mxu0
    %v279 = vadd.f32 0.0, %v278
    %280 = vmatmul.f32.gmra.mxu0 %v198
    %v281 = vpop.f32.mrf.mxu0
    %v282 = vadd.f32 0.0, %v281
    %283 = vmatmul.f32.gmra.mxu0 %v199
    %v284 = vpop.f32.mrf.mxu0
    %v285 = vadd.f32 0.0, %v284
    %286 = vmatmul.f32.gmra.mxu0 %v200
    %v287 = vpop.f32.mrf.mxu0
    %v288 = vadd.f32 0.0, %v287
    %289 = vmatmul.f32.gmra.mxu0 %v201
    %v290 = vpop.f32.mrf.mxu0
    %v291 = vadd.f32 0.0, %v290
    %292 = vmatmul.f32.gmra.mxu0 %v202
    %v293 = vpop.f32.mrf.mxu0
    %v294 = vadd.f32 0.0, %v293
    %295 = vmatmul.f32.gmra.mxu0 %v203
    %v296 = vpop.f32.mrf.mxu0
    %v297 = vadd.f32 0.0, %v296
    %298 = vmatmul.f32.gmra.mxu0 %v204
    %v299 = vpop.f32.mrf.mxu0
    %v300 = vadd.f32 0.0, %v299
    %301 = vdwg.mxu0
    %v302 = vadd.f32 %v205, %v255
    %v303 = vadd.f32 %v206, %v258
    %v304 = vadd.f32 %v207, %v261
    %v305 = vadd.f32 %v208, %v264
    %v306 = vadd.f32 %v209, %v267
    %v307 = vadd.f32 %v210, %v270
    %v308 = vadd.f32 %v211, %v273
    %v309 = vadd.f32 %v212, %v276
    %v310 = vadd.f32 %v213, %v279
    %v311 = vadd.f32 %v214, %v282
    %v312 = vadd.f32 %v215, %v285
    %v313 = vadd.f32 %v216, %v288
    %v314 = vadd.f32 %v217, %v291
    %v315 = vadd.f32 %v218, %v294
    %v316 = vadd.f32 %v219, %v297
    %v317 = vadd.f32 %v220, %v300
    %318 = vst [vmem:[#allocation2] sm:$0xff] %v302
    %319 = vst [vmem:[#allocation2 + $0x8] sm:$0xff] %v303
    %320 = vst [vmem:[#allocation2 + $0x10] sm:$0xff] %v304
    %321 = vst [vmem:[#allocation2 + $0x18] sm:$0xff] %v305
    %322 = vst [vmem:[#allocation2 + $0x20] sm:$0xff] %v306
    %323 = vst [vmem:[#allocation2 + $0x28] sm:$0xff] %v307
    %324 = vst [vmem:[#allocation2 + $0x30] sm:$0xff] %v308
    %325 = vst [vmem:[#allocation2 + $0x38] sm:$0xff] %v309
    %326 = vst [vmem:[#allocation2 + $0x40] sm:$0xff] %v310
    %327 = vst [vmem:[#allocation2 + $0x48] sm:$0xff] %v311
    %328 = vst [vmem:[#allocation2 + $0x50] sm:$0xff] %v312
    %329 = vst [vmem:[#allocation2 + $0x58] sm:$0xff] %v313
    %330 = vst [vmem:[#allocation2 + $0x60] sm:$0xff] %v314
    %331 = vst [vmem:[#allocation2 + $0x68] sm:$0xff] %v315
    %332 = vst [vmem:[#allocation2 + $0x70] sm:$0xff] %v316
    %333 = vst [vmem:[#allocation2 + $0x78] sm:$0xff] %v317
    // Predicated region
    $region38: #{tpu_custom_call.1} parent=1 // pred_check
      %p334 = pneg %p68
    $region39: #{tpu_custom_call.1} parent=1 // pred_check_branch
      %336 = sbr.rel (%p334) target = $region41
    $region40: #{tpu_custom_call.1} parent=1 // pred_region
      %v337 = vld [vmem:[#allocation2] sm:$0xff]
      %v338 = vld [vmem:[#allocation2 + $0x8] sm:$0xff]
      %v339 = vld [vmem:[#allocation2 + $0x10] sm:$0xff]
      %v340 = vld [vmem:[#allocation2 + $0x18] sm:$0xff]
      %v341 = vld [vmem:[#allocation2 + $0x20] sm:$0xff]
      %v342 = vld [vmem:[#allocation2 + $0x28] sm:$0xff]
      %v343 = vld [vmem:[#allocation2 + $0x30] sm:$0xff]
      %v344 = vld [vmem:[#allocation2 + $0x38] sm:$0xff]
      %v345 = vld [vmem:[#allocation2 + $0x40] sm:$0xff]
      %v346 = vld [vmem:[#allocation2 + $0x48] sm:$0xff]
      %v347 = vld [vmem:[#allocation2 + $0x50] sm:$0xff]
      %v348 = vld [vmem:[#allocation2 + $0x58] sm:$0xff]
      %v349 = vld [vmem:[#allocation2 + $0x60] sm:$0xff]
      %v350 = vld [vmem:[#allocation2 + $0x68] sm:$0xff]
      %v351 = vld [vmem:[#allocation2 + $0x70] sm:$0xff]
      %v352 = vld [vmem:[#allocation2 + $0x78] sm:$0xff]
      %v353 = vld [vmem:[%s4] sm:$0x1]
      %v355 = vperm.slane %v353, 0
      %v357 = vadd.f32 %v337, %v355
      %v358 = vadd.f32 %v338, %v355
      %v359 = vadd.f32 %v339, %v355
      %v360 = vadd.f32 %v340, %v355
      %v361 = vadd.f32 %v341, %v355
      %v362 = vadd.f32 %v342, %v355
      %v363 = vadd.f32 %v343, %v355
      %v364 = vadd.f32 %v344, %v355
      %v365 = vadd.f32 %v345, %v355
      %v366 = vadd.f32 %v346, %v355
      %v367 = vadd.f32 %v347, %v355
      %v368 = vadd.f32 %v348, %v355
      %v369 = vadd.f32 %v349, %v355
      %v370 = vadd.f32 %v350, %v355
      %v371 = vadd.f32 %v351, %v355
      %v372 = vadd.f32 %v352, %v355
      %373 = vst [vmem:[#allocation9] sm:$0xff] %v357
      %374 = vst [vmem:[#allocation9 + $0x8] sm:$0xff] %v358
      %375 = vst [vmem:[#allocation9 + $0x10] sm:$0xff] %v359
      %376 = vst [vmem:[#allocation9 + $0x18] sm:$0xff] %v360
      %377 = vst [vmem:[#allocation9 + $0x20] sm:$0xff] %v361
      %378 = vst [vmem:[#allocation9 + $0x28] sm:$0xff] %v362
      %379 = vst [vmem:[#allocation9 + $0x30] sm:$0xff] %v363
      %380 = vst [vmem:[#allocation9 + $0x38] sm:$0xff] %v364
      %381 = vst [vmem:[#allocation9 + $0x40] sm:$0xff] %v365
      %382 = vst [vmem:[#allocation9 + $0x48] sm:$0xff] %v366
      %383 = vst [vmem:[#allocation9 + $0x50] sm:$0xff] %v367
      %384 = vst [vmem:[#allocation9 + $0x58] sm:$0xff] %v368
      %385 = vst [vmem:[#allocation9 + $0x60] sm:$0xff] %v369
      %386 = vst [vmem:[#allocation9 + $0x68] sm:$0xff] %v370
      %387 = vst [vmem:[#allocation9 + $0x70] sm:$0xff] %v371
      %388 = vst [vmem:[#allocation9 + $0x78] sm:$0xff] %v372
    $region41: #{tpu_custom_call.1} parent=1 // pred_fallthru
      _
    // Predicated region
    $region42: #{tpu_custom_call.1} parent=1 // pred_check
      _
    $region43: #{tpu_custom_call.1} parent=1 // pred_check_branch
      %390 = sbr.rel (0) target = $region45
    $region44: #{tpu_custom_call.1} parent=1 // pred_region
      %392 = vsyncadd [#allocation5], 0
      %s393 = sshll.u32 [#allocation9], 4
      %s394 = int_to_ptr.vmem [resolvable:$true] %s393
      %s395 = sshll.u32 %s5, 4
      %s396 = int_to_ptr.hbm [resolvable:$true] %s395
      %401 = dma.vmem_to_hbm [thread:$0]  %s394, 2048, %s396, [#allocation5], 128, 128, 8
    $region45: #{tpu_custom_call.1} parent=1 // pred_fallthru
      _
    // Predicated region
    $region46: #{tpu_custom_call.1} parent=1 // pred_check
      _
    $region47: #{tpu_custom_call.1} parent=1 // pred_check_branch
      %403 = sbr.rel (0) target = $region49
    $region48: #{tpu_custom_call.1} parent=1 // pred_region
      %405 = dma.done [#allocation5], 2048
    $region49: #{tpu_custom_call.1} parent=1 // pred_fallthru
      _
    %406 = vsyncpa [#allocation4], 1
    %407 = vsyncpa [#allocation7], 1
    %408 = vsyncpa [#allocation5], 1

</llo_original>
